<compile_context>
chip_gen: v5e
topology: v5e:2x2
jax: 0.10.0
libtpu: 0.0.40
codegen_flags: <defaults>
</compile_context>

<pallas_src>
import numpy as np
import jax
import jax.numpy as jnp
from jax.experimental import pallas as pl
from jax.experimental.pallas import tpu as pltpu


LANES = 128  # TPU vreg lane width; pad the class axis so output stores are unmasked


# ----------------------------- Pallas kernel ------------------------------

def _fused_kernel(x_ref, adj_ref, w1_ref, b1_ref, w2_ref, b2_ref,
                  w3_ref, b3_ref, out_ref):
    """One grid step == one relation r.

    out_ref's index_map is constant across r, so the output tile stays VMEM
    resident and doubles as the f32 accumulator of the fused head matmul:
        z = b3 + sum_r relu(adj_r @ relu(x_r @ W1_r + b1_r) @ W2_r + b2_r) @ W3_r
    which equals concat(g_r, -1) @ W3 + b3.  The last step applies log_softmax.
    """
    r = pl.program_id(0)

    @pl.when(r == 0)
    def _init():
        # b3 is padded with a large negative value on the padded class lanes so
        # they vanish in the softmax; real lanes carry the true bias.
        out_ref[...] = jnp.broadcast_to(b3_ref[...], out_ref.shape)

    # h = relu(x_r @ W1_r + b1_r)        (dropout is identity in eval mode)
    h = jnp.dot(x_ref[...], w1_ref[...], preferred_element_type=jnp.float32)
    h = jnp.maximum(h + b1_ref[...], 0.0)
    # m = adj_r @ h                      (dense spmm on the type block)
    m = jnp.dot(adj_ref[...], h, preferred_element_type=jnp.float32)
    # g = relu(m @ W2_r + b2_r)
    g = jnp.dot(m, w2_ref[...], preferred_element_type=jnp.float32)
    g = jnp.maximum(g + b2_ref[...], 0.0)
    # head contribution of this relation
    out_ref[...] += jnp.dot(g, w3_ref[...], preferred_element_type=jnp.float32)

    @pl.when(r == pl.num_programs(0) - 1)
    def _finalize():
        z = out_ref[...]
        zmax = jnp.max(z, axis=-1, keepdims=True)
        lse = jnp.log(jnp.sum(jnp.exp(z - zmax), axis=-1, keepdims=True)) + zmax
        out_ref[...] = z - lse


def _rel_spec(*tail):
    # Whole-array block per relation: relation axis squeezed, rest full-size.
    return pl.BlockSpec((pl.Squeezed(),) + tuple(tail),
                        lambda r: (r,) + (0,) * len(tail))


# ------------------------------ jitted forward ----------------------------

@jax.jit
def hetero_gnn_forward(xs, adjs, params):
    """xs: [R, n_src, F], adjs: [R, n_dst, n_src]; params mirror the torch module."""
    R, n_src, feat = xs.shape
    n_dst = adjs.shape[1]
    hidden = params["convs"][0][0].shape[1]
    num_classes = params["lin1"][0].shape[1]
    cp = LANES * pl.cdiv(num_classes, LANES)   # lane-dense (padded) class axis

    # Stack per-relation weights so one pallas_call covers every relation.
    w1s = jnp.stack([w for w, _ in params["convs"]])
    b1s = jnp.stack([b for _, b in params["convs"]])
    w2s = jnp.stack([w for w, _ in params["sage_convs"]])
    b2s = jnp.stack([b for _, b in params["sage_convs"]])
    w3, b3 = params["lin1"]
    w3s = jnp.pad(w3.reshape(R, hidden, num_classes),
                  ((0, 0), (0, 0), (0, cp - num_classes)))
    b3p = jnp.pad(b3, ((0, 0), (0, cp - num_classes)), constant_values=-1e30)

    # TODO(synk): for production-size graphs cast xs/adjs/weights to bf16 (keep
    # preferred_element_type=f32) and tile the adj @ h spmm with VMEM-sized
    # (v7x: 64 MiB) adj tiles; at this demo size f32 whole-array blocks are fine.
    out_padded = pl.pallas_call(
        _fused_kernel,
        grid=(R,),
        out_shape=jax.ShapeDtypeStruct((n_dst, cp), jnp.float32),
        in_specs=[
            _rel_spec(n_src, feat),      # xs
            _rel_spec(n_dst, n_src),     # adjs
            _rel_spec(feat, hidden),     # W1 per relation
            _rel_spec(1, hidden),        # b1 per relation
            _rel_spec(hidden, hidden),   # W2 per relation
            _rel_spec(1, hidden),        # b2 per relation
            _rel_spec(hidden, cp),       # W3 slice per relation (padded cols)
            pl.BlockSpec((1, cp), lambda r: (0, 0)),   # b3 (same block every step)
        ],
        out_specs=pl.BlockSpec((n_dst, cp), lambda r: (0, 0)),
        # Output block is accumulated across the relation axis -> "arbitrary".
        # (If the head were not fused, "parallel" would let v7x's two
        # TensorCores split the relations.)
        compiler_params=pltpu.CompilerParams(
            dimension_semantics=("arbitrary",)),
    )(xs, adjs, w1s, b1s, w2s, b2s, w3s, b3p)

    return out_padded[:, :num_classes]


# ------------------------- host-side block extraction ---------------------

def prepare_inputs(x, adj, node_type_mask_np, num_relations):
    """Extract node-type blocks once on the host with static numpy indices.

    Relation r (r < num_relations <= T) uses
      xs[r]   = x[type r+1 nodes]
      adjs[r] = adj[type-1 rows, type-(r+1) cols]
    Only the num_relations blocks the forward consumes are built.
    """
    T = int(node_type_mask_np.max())
    assert num_relations <= T
    idx = [np.nonzero(node_type_mask_np == t)[0] for t in range(1, T + 1)]
    counts = {len(idx[r]) for r in range(num_relations)}
    # TODO(synk): unequal per-type node counts would need padded blocks + masks
    # to keep a single stacked [R, ...] layout.
    assert len(counts) == 1, "stacked layout assumes equal per-type node counts"
    x_np = np.asarray(x)
    adj_np = np.asarray(adj)
    xs = np.stack([x_np[idx[r]] for r in range(num_relations)])
    adjs = np.stack([adj_np[np.ix_(idx[0], idx[r])] for r in range(num_relations)])
    return jnp.asarray(xs), jnp.asarray(adjs)


# ------------------------------ reference ---------------------------------

def reference_forward(x, adj, node_type_mask_np, params, num_relations):
    # pure-JAX reference, structured exactly like the PyTorch module
    T = int(node_type_mask_np.max())
    idx = [np.nonzero(node_type_mask_np == t)[0] for t in range(1, T + 1)]
    x_list = [x[jnp.asarray(ii)] for ii in idx]
    adj_list = [adj[jnp.asarray(idx[i])[:, None], jnp.asarray(idx[j])[None, :]]
                for i in range(T) for j in range(T)]
    outs = []
    for r in range(num_relations):
        w1, b1 = params["convs"][r]
        w2, b2 = params["sage_convs"][r]
        h = jax.nn.relu(x_list[r] @ w1 + b1)
        h = adj_list[r] @ h
        outs.append(jax.nn.relu(h @ w2 + b2))
    h_cat = jnp.concatenate(outs, axis=-1)
    w3, b3 = params["lin1"]
    z = h_cat @ w3 + b3
    return jax.nn.log_softmax(z, axis=-1)


# ------------------------------ params ------------------------------------

def init_linear(key, fan_in, fan_out):
    # torch.nn.Linear default init: U(-1/sqrt(fan_in), 1/sqrt(fan_in))
    k = 1.0 / np.sqrt(fan_in)
    kw, kb = jax.random.split(key)
    w = jax.random.uniform(kw, (fan_in, fan_out), jnp.float32, -k, k)
    b = jax.random.uniform(kb, (1, fan_out), jnp.float32, -k, k)
    return w, b


# --------------------------------- main ------------------------------------

if __name__ == "__main__":
    # module hyper-parameters
    num_node_features = 16
    hidden_dim = 32
    num_classes = 8
    num_relations = 3      # == number of node types used in the forward pass
    num_layers = 2         # unused by the reference forward
    T = 3                  # node types 1..3 (type 0 nodes are dropped)

    # deterministic node-type mask: 2 nodes of type 0, 8 each of types 1..3
    mask_np = np.array([0] * 2 + [1] * 8 + [2] * 8 + [3] * 8, dtype=np.int32)
    mask_np = np.random.RandomState(0).permutation(mask_np)
    N = mask_np.size

    key = jax.random.PRNGKey(0)
    keys = jax.random.split(key, 3 + 2 * num_relations)
    x = jax.random.normal(keys[0], (N, num_node_features), jnp.float32)
    adj = jax.random.uniform(keys[1], (N, N), jnp.float32)

    params = {
        "convs": [init_linear(keys[2 + r], num_node_features, hidden_dim)
                  for r in range(num_relations)],
        "sage_convs": [init_linear(keys[2 + num_relations + r], hidden_dim, hidden_dim)
                       for r in range(num_relations)],
        "lin1": init_linear(keys[2 + 2 * num_relations],
                            num_relations * hidden_dim, num_classes),
    }

    xs, adjs = prepare_inputs(x, adj, mask_np, num_relations)
    out = hetero_gnn_forward(xs, adjs, params)
    out = jax.block_until_ready(out)

    ref = reference_forward(x, adj, mask_np, params, num_relations)
    np.testing.assert_allclose(np.asarray(out), np.asarray(ref),
                               rtol=1e-5, atol=1e-5)

    print("KERNEL_OK")
</pallas_src>

<mosaic_0001>
module attributes {stable_mosaic.version = 11 : i64} {
  func.func @_fused_kernel(%arg0: i32, %arg1: memref<1x8x16xf32, #tpu.memory_space<vmem>>, %arg2: memref<1x8x8xf32, #tpu.memory_space<vmem>>, %arg3: memref<1x16x32xf32, #tpu.memory_space<vmem>>, %arg4: memref<1x1x32xf32, #tpu.memory_space<vmem>>, %arg5: memref<1x32x32xf32, #tpu.memory_space<vmem>>, %arg6: memref<1x1x32xf32, #tpu.memory_space<vmem>>, %arg7: memref<1x32x128xf32, #tpu.memory_space<vmem>>, %arg8: memref<1x128xf32, #tpu.memory_space<vmem>>, %arg9: memref<8x128xf32, #tpu.memory_space<vmem>>) attributes {dimension_semantics = [#tpu.dimension_semantics<arbitrary>], iteration_bounds = array<i64: 3>, scalar_prefetch = 0 : i64, scratch_operands = 0 : i64, tpu.core_type = #tpu.core_type<tc>, window_params = [{transform_indices = @transform_0, window_bounds = array<i64: 1, 8, 16>}, {transform_indices = @transform_1, window_bounds = array<i64: 1, 8, 8>}, {transform_indices = @transform_2, window_bounds = array<i64: 1, 16, 32>}, {transform_indices = @transform_3, window_bounds = array<i64: 1, 1, 32>}, {transform_indices = @transform_4, window_bounds = array<i64: 1, 32, 32>}, {transform_indices = @transform_5, window_bounds = array<i64: 1, 1, 32>}, {transform_indices = @transform_6, window_bounds = array<i64: 1, 32, 128>}, {pipeline_mode = #tpu.pipeline_mode<synchronous>, transform_indices = @transform_7, window_bounds = array<i64: 1, 128>}, {pipeline_mode = #tpu.pipeline_mode<synchronous>, transform_indices = @transform_8, window_bounds = array<i64: 8, 128>}]} {
    %c0_i32 = arith.constant 0 : i32
    %0 = arith.cmpi eq, %arg0, %c0_i32 : i32
    %1 = arith.extui %0 : i1 to i32
    %c0_i32_0 = arith.constant 0 : i32
    %2 = arith.cmpi ne, %1, %c0_i32_0 : i32
    scf.if %2 {
      %c0_31 = arith.constant 0 : index
      %c0_32 = arith.constant 0 : index
      %35 = vector.load %arg8[%c0_31, %c0_32] : memref<1x128xf32, #tpu.memory_space<vmem>>, vector<1x128xf32>
      %36 = vector.shape_cast %35 : vector<1x128xf32> to vector<1x128xf32>
      %37 = vector.broadcast %36 : vector<1x128xf32> to vector<8x128xf32>
      %c0_33 = arith.constant 0 : index
      %c0_34 = arith.constant 0 : index
      %38 = vector.load %arg9[%c0_33, %c0_34] : memref<8x128xf32, #tpu.memory_space<vmem>>, vector<8x128xf32>
      tpu.vector_store %arg9[%c0_33, %c0_34], %37 {strides = array<i32>} : memref<8x128xf32, #tpu.memory_space<vmem>>, vector<8x128xf32>,
    } else {
    }
    %c0 = arith.constant 0 : index
    %c0_1 = arith.constant 0 : index
    %c0_2 = arith.constant 0 : index
    %3 = vector.load %arg1[%c0, %c0_1, %c0_2] : memref<1x8x16xf32, #tpu.memory_space<vmem>>, vector<1x8x16xf32>
    %4 = vector.shape_cast %3 : vector<1x8x16xf32> to vector<8x16xf32>
    %c0_3 = arith.constant 0 : index
    %c0_4 = arith.constant 0 : index
    %c0_5 = arith.constant 0 : index
    %5 = vector.load %arg3[%c0_3, %c0_4, %c0_5] : memref<1x16x32xf32, #tpu.memory_space<vmem>>, vector<1x16x32xf32>
    %6 = vector.shape_cast %5 : vector<1x16x32xf32> to vector<16x32xf32>
    %cst = arith.constant dense<0.000000e+00> : vector<8x32xf32>
    %7 = tpu.matmul %4, %6, %cst {dimension_numbers = #tpu.dot_dimension_numbers<[1], [0], [0], [1], [0, 0, 1, 1], [], []>} : vector<8x16xf32>, vector<16x32xf32>, vector<8x32xf32> -> vector<8x32xf32>
    %c0_6 = arith.constant 0 : index
    %c0_7 = arith.constant 0 : index
    %c0_8 = arith.constant 0 : index
    %8 = vector.load %arg4[%c0_6, %c0_7, %c0_8] : memref<1x1x32xf32, #tpu.memory_space<vmem>>, vector<1x1x32xf32>
    %9 = vector.shape_cast %8 : vector<1x1x32xf32> to vector<1x32xf32>
    %10 = vector.broadcast %9 : vector<1x32xf32> to vector<8x32xf32>
    %11 = arith.addf %7, %10 : vector<8x32xf32>
    %cst_9 = arith.constant 0.000000e+00 : f32
    %12 = vector.broadcast %cst_9 : f32 to vector<8x32xf32>
    %13 = arith.maximumf %11, %12 : vector<8x32xf32>
    %c0_10 = arith.constant 0 : index
    %c0_11 = arith.constant 0 : index
    %c0_12 = arith.constant 0 : index
    %14 = vector.load %arg2[%c0_10, %c0_11, %c0_12] : memref<1x8x8xf32, #tpu.memory_space<vmem>>, vector<1x8x8xf32>
    %15 = vector.shape_cast %14 : vector<1x8x8xf32> to vector<8x8xf32>
    %cst_13 = arith.constant dense<0.000000e+00> : vector<8x32xf32>
    %16 = tpu.matmul %15, %13, %cst_13 {dimension_numbers = #tpu.dot_dimension_numbers<[1], [0], [0], [1], [0, 0, 1, 1], [], []>} : vector<8x8xf32>, vector<8x32xf32>, vector<8x32xf32> -> vector<8x32xf32>
    %c0_14 = arith.constant 0 : index
    %c0_15 = arith.constant 0 : index
    %c0_16 = arith.constant 0 : index
    %17 = vector.load %arg5[%c0_14, %c0_15, %c0_16] : memref<1x32x32xf32, #tpu.memory_space<vmem>>, vector<1x32x32xf32>
    %18 = vector.shape_cast %17 : vector<1x32x32xf32> to vector<32x32xf32>
    %cst_17 = arith.constant dense<0.000000e+00> : vector<8x32xf32>
    %19 = tpu.matmul %16, %18, %cst_17 {dimension_numbers = #tpu.dot_dimension_numbers<[1], [0], [0], [1], [0, 0, 1, 1], [], []>} : vector<8x32xf32>, vector<32x32xf32>, vector<8x32xf32> -> vector<8x32xf32>
    %c0_18 = arith.constant 0 : index
    %c0_19 = arith.constant 0 : index
    %c0_20 = arith.constant 0 : index
    %20 = vector.load %arg6[%c0_18, %c0_19, %c0_20] : memref<1x1x32xf32, #tpu.memory_space<vmem>>, vector<1x1x32xf32>
    %21 = vector.shape_cast %20 : vector<1x1x32xf32> to vector<1x32xf32>
    %22 = vector.broadcast %21 : vector<1x32xf32> to vector<8x32xf32>
    %23 = arith.addf %19, %22 : vector<8x32xf32>
    %cst_21 = arith.constant 0.000000e+00 : f32
    %24 = vector.broadcast %cst_21 : f32 to vector<8x32xf32>
    %25 = arith.maximumf %23, %24 : vector<8x32xf32>
    %c0_22 = arith.constant 0 : index
    %c0_23 = arith.constant 0 : index
    %26 = vector.load %arg9[%c0_22, %c0_23] : memref<8x128xf32, #tpu.memory_space<vmem>>, vector<8x128xf32>
    %c0_24 = arith.constant 0 : index
    %c0_25 = arith.constant 0 : index
    %c0_26 = arith.constant 0 : index
    %27 = vector.load %arg7[%c0_24, %c0_25, %c0_26] : memref<1x32x128xf32, #tpu.memory_space<vmem>>, vector<1x32x128xf32>
    %28 = vector.shape_cast %27 : vector<1x32x128xf32> to vector<32x128xf32>
    %cst_27 = arith.constant dense<0.000000e+00> : vector<8x128xf32>
    %29 = tpu.matmul %25, %28, %cst_27 {dimension_numbers = #tpu.dot_dimension_numbers<[1], [0], [0], [1], [0, 0, 1, 1], [], []>} : vector<8x32xf32>, vector<32x128xf32>, vector<8x128xf32> -> vector<8x128xf32>
    %30 = arith.addf %26, %29 : vector<8x128xf32>
    %c0_28 = arith.constant 0 : index
    %c0_29 = arith.constant 0 : index
    %31 = vector.load %arg9[%c0_28, %c0_29] : memref<8x128xf32, #tpu.memory_space<vmem>>, vector<8x128xf32>
    tpu.vector_store %arg9[%c0_28, %c0_29], %30 {strides = array<i32>} : memref<8x128xf32, #tpu.memory_space<vmem>>, vector<8x128xf32>,
    %c2_i32 = arith.constant 2 : i32
    %32 = arith.cmpi eq, %arg0, %c2_i32 : i32
    %33 = arith.extui %32 : i1 to i32
    %c0_i32_30 = arith.constant 0 : i32
    %34 = arith.cmpi ne, %33, %c0_i32_30 : i32
    scf.if %34 {
      %c0_31 = arith.constant 0 : index
      %c0_32 = arith.constant 0 : index
      %35 = vector.load %arg9[%c0_31, %c0_32] : memref<8x128xf32, #tpu.memory_space<vmem>>, vector<8x128xf32>
      %cst_33 = arith.constant dense<0xFF800000> : vector<8xf32>
      %36 = vector.multi_reduction <maximumf>, %35, %cst_33 [1] : vector<8x128xf32> to vector<8xf32>
      %37 = vector.shape_cast %36 : vector<8xf32> to vector<8x1xf32>
      %38 = vector.broadcast %37 : vector<8x1xf32> to vector<8x128xf32>
      %39 = arith.subf %35, %38 : vector<8x128xf32>
      %40 = math.exp %39 : vector<8x128xf32>
      %cst_34 = arith.constant dense<0.000000e+00> : vector<8xf32>
      %41 = vector.multi_reduction <add>, %40, %cst_34 [1] : vector<8x128xf32> to vector<8xf32>
      %42 = vector.shape_cast %41 : vector<8xf32> to vector<8x1xf32>
      %43 = math.log %42 : vector<8x1xf32>
      %44 = arith.addf %43, %37 : vector<8x1xf32>
      %45 = vector.broadcast %44 : vector<8x1xf32> to vector<8x128xf32>
      %46 = arith.subf %35, %45 : vector<8x128xf32>
      %c0_35 = arith.constant 0 : index
      %c0_36 = arith.constant 0 : index
      %47 = vector.load %arg9[%c0_35, %c0_36] : memref<8x128xf32, #tpu.memory_space<vmem>>, vector<8x128xf32>
      tpu.vector_store %arg9[%c0_35, %c0_36], %46 {strides = array<i32>} : memref<8x128xf32, #tpu.memory_space<vmem>>, vector<8x128xf32>,
    } else {
    }
    return
  }
  func.func @transform_0(%arg0: i32) -> (i32, i32, i32) {
    %c0_i32 = arith.constant 0 : i32
    %c0_i32_0 = arith.constant 0 : i32
    %c0_i32_1 = arith.constant 0 : i32
    return %arg0, %c0_i32, %c0_i32_0 : i32, i32, i32
  }
  func.func @transform_1(%arg0: i32) -> (i32, i32, i32) {
    %c0_i32 = arith.constant 0 : i32
    %c0_i32_0 = arith.constant 0 : i32
    %c0_i32_1 = arith.constant 0 : i32
    return %arg0, %c0_i32, %c0_i32_0 : i32, i32, i32
  }
  func.func @transform_2(%arg0: i32) -> (i32, i32, i32) {
    %c0_i32 = arith.constant 0 : i32
    %c0_i32_0 = arith.constant 0 : i32
    %c0_i32_1 = arith.constant 0 : i32
    return %arg0, %c0_i32, %c0_i32_0 : i32, i32, i32
  }
  func.func @transform_3(%arg0: i32) -> (i32, i32, i32) {
    %c0_i32 = arith.constant 0 : i32
    %c0_i32_0 = arith.constant 0 : i32
    %c0_i32_1 = arith.constant 0 : i32
    return %arg0, %c0_i32, %c0_i32_0 : i32, i32, i32
  }
  func.func @transform_4(%arg0: i32) -> (i32, i32, i32) {
    %c0_i32 = arith.constant 0 : i32
    %c0_i32_0 = arith.constant 0 : i32
    %c0_i32_1 = arith.constant 0 : i32
    return %arg0, %c0_i32, %c0_i32_0 : i32, i32, i32
  }
  func.func @transform_5(%arg0: i32) -> (i32, i32, i32) {
    %c0_i32 = arith.constant 0 : i32
    %c0_i32_0 = arith.constant 0 : i32
    %c0_i32_1 = arith.constant 0 : i32
    return %arg0, %c0_i32, %c0_i32_0 : i32, i32, i32
  }
  func.func @transform_6(%arg0: i32) -> (i32, i32, i32) {
    %c0_i32 = arith.constant 0 : i32
    %c0_i32_0 = arith.constant 0 : i32
    %c0_i32_1 = arith.constant 0 : i32
    return %arg0, %c0_i32, %c0_i32_0 : i32, i32, i32
  }
  func.func @transform_7(%arg0: i32) -> (i32, i32) {
    %c0_i32 = arith.constant 0 : i32
    %c0_i32_0 = arith.constant 0 : i32
    %c0_i32_1 = arith.constant 0 : i32
    return %c0_i32, %c0_i32_0 : i32, i32
  }
  func.func @transform_8(%arg0: i32) -> (i32, i32) {
    %c0_i32 = arith.constant 0 : i32
    %c0_i32_0 = arith.constant 0 : i32
    %c0_i32_1 = arith.constant 0 : i32
    return %c0_i32, %c0_i32_0 : i32, i32
  }
}

</mosaic_0001>

<llo_original>
// kernel: hetero_gnn_forward.1
$region0: #{hetero_gnn_forward.1}
  #allocation0 [shape = 'u32[]', space=smem, size = 0x4, offset = 0x4, fixed_abs, tag = 'smem constant byte address 0x4 - core index']
  #allocation1 [shape = 'u32[72,128]{1,0:T(1,128)}', space=vmem, size = 0x9000, scoped, tag = 'internal scratch']
  %s0 = inlined_call_operand.vmem [shape: f32[3,8,16], index: 0, kind: input, shape index: {}]
  %s1 = inlined_call_operand.vmem [shape: f32[3,8,8], index: 1, kind: input, shape index: {}]
  %s2 = inlined_call_operand.vmem [shape: f32[3,16,32], index: 2, kind: input, shape index: {}]
  %s3 = inlined_call_operand.vmem [shape: f32[3,1,32], index: 3, kind: input, shape index: {}]
  %s4 = inlined_call_operand.vmem [shape: f32[3,32,32], index: 4, kind: input, shape index: {}]
  %s5 = inlined_call_operand.vmem [shape: f32[3,1,32], index: 5, kind: input, shape index: {}]
  %s6 = inlined_call_operand.vmem [shape: f32[3,32,128], index: 6, kind: input, shape index: {}]
  %s7 = inlined_call_operand.vmem [shape: f32[1,128], index: 7, kind: input, shape index: {}]
  %s8 = inlined_call_operand.hbm [shape: f32[8,128], index: 8, kind: output, shape index: {}]
  %s9 = sld [smem:[#allocation0]]
  $region73: #{hetero_gnn_forward.1} parent=0
    _
  %s11 = ssub.s32 1, %s9
  %s12 = scalar_select 0, %s11, %s9
  $region1: #{hetero_gnn_forward.1} parent=0
    #allocation2 [shape = 'u8[4096]{0}', space=vmem, size = 0x1000, scoped, tag = 'output window, operand 0, single buffered']
    #allocation3 [shape = 's32[2]{0}', space=sflag, size = 0x8, scoped, tag = 'scoped memory for hetero_gnn_forward.1']
    %13 = vsyncpa [#allocation3], 0
    loop: start=0, step=1, limit=5
    $region2: #{hetero_gnn_forward.1} parent=1 // loop_pre_header
      _
    $region3: #{hetero_gnn_forward.1} parent=1 // loop_header
      %s15 = sphi 0, %s19
      %p16 = scmp.ge.s32.totalorder %s15, 5
      %s25 = sphi 0, %s27
      %s28 = sphi 0, %s25
      %s29 = sphi 0, %s28
      %s45 = sphi 0, %s29
      %s51 = sphi 0, %s53
      %s54 = sphi 0, %s51
      %s55 = sphi 0, %s54
      %s71 = sphi 0, %s55
      %s77 = sphi 0, %s79
      %s80 = sphi 0, %s77
      %s81 = sphi 0, %s80
      %s97 = sphi 0, %s81
      %s103 = sphi 0, %s105
      %s106 = sphi 0, %s103
      %s107 = sphi 0, %s106
      %s123 = sphi 0, %s107
      %s129 = sphi 0, %s131
      %s132 = sphi 0, %s129
      %s133 = sphi 0, %s132
      %s149 = sphi 0, %s133
      %s155 = sphi 0, %s157
      %s158 = sphi 0, %s155
      %s159 = sphi 0, %s158
      %s175 = sphi 0, %s159
      %s181 = sphi 0, %s183
      %s184 = sphi 0, %s181
      %s185 = sphi 0, %s184
      %s201 = sphi 0, %s185
      %s205 = sphi 0, %s205
      %s207 = sphi 0, %s205
      %s208 = sphi 0, %s207
      %s222 = sphi 0, %s208
      %s226 = sphi 0, %s226
      %s228 = sphi 0, %s226
      %s229 = sphi 0, %s228
      %s243 = sphi 0, %s229
    $region4: #{hetero_gnn_forward.1} parent=1 // loop_header_branch
      %18 = sbr.rel (%p16) target = $region8
    $region5: #{hetero_gnn_forward.1} parent=1 // loop_body
      %s20 = ssub.s32 %s15, 1
      %s21 = ssub.s32 %s15, 2
      %s22 = sadd.s32 %s15, 1
      %s23 = ssub.s32 %s15, %s22
      %p24 = scmp.eq.s32.totalorder %s23, 0
      %s26 = sadd.s32 %s25, 1
      %s27 = scalar_select %p24, %s25, %s26
      %p30 = pneg %p24
      %p31 = scmp.eq.s32.totalorder %s15, 2
      %p32 = por %p30, %p31
      %p33 = scmp.ne.s32.totalorder %s25, %s28
      %p34 = scmp.eq.s32.totalorder %s15, 0
      %p35 = por %p33, %p34
      %p36 = scmp.ne.s32.totalorder %s25, %s28
      %p37 = scmp.eq.s32.totalorder %s20, 2
      %p38 = por %p36, %p37
      %p39 = scmp.ne.s32.totalorder %s28, %s29
      %p40 = scmp.eq.s32.totalorder %s20, 0
      %p41 = por %p39, %p40
      %p42 = scmp.ne.s32.totalorder %s28, %s29
      %p43 = scmp.eq.s32.totalorder %s21, 2
      %p44 = por %p42, %p43
      %p46 = scmp.ne.s32.totalorder %s29, %s45
      %p47 = scmp.eq.s32.totalorder %s21, 0
      %p48 = por %p46, %p47
      %s49 = ssub.s32 %s15, %s22
      %p50 = scmp.eq.s32.totalorder %s49, 0
      %s52 = sadd.s32 %s51, 1
      %s53 = scalar_select %p50, %s51, %s52
      %p56 = pneg %p50
      %p57 = scmp.eq.s32.totalorder %s15, 2
      %p58 = por %p56, %p57
      %p59 = scmp.ne.s32.totalorder %s51, %s54
      %p60 = scmp.eq.s32.totalorder %s15, 0
      %p61 = por %p59, %p60
      %p62 = scmp.ne.s32.totalorder %s51, %s54
      %p63 = scmp.eq.s32.totalorder %s20, 2
      %p64 = por %p62, %p63
      %p65 = scmp.ne.s32.totalorder %s54, %s55
      %p66 = scmp.eq.s32.totalorder %s20, 0
      %p67 = por %p65, %p66
      %p68 = scmp.ne.s32.totalorder %s54, %s55
      %p69 = scmp.eq.s32.totalorder %s21, 2
      %p70 = por %p68, %p69
      %p72 = scmp.ne.s32.totalorder %s55, %s71
      %p73 = scmp.eq.s32.totalorder %s21, 0
      %p74 = por %p72, %p73
      %s75 = ssub.s32 %s15, %s22
      %p76 = scmp.eq.s32.totalorder %s75, 0
      %s78 = sadd.s32 %s77, 1
      %s79 = scalar_select %p76, %s77, %s78
      %p82 = pneg %p76
      %p83 = scmp.eq.s32.totalorder %s15, 2
      %p84 = por %p82, %p83
      %p85 = scmp.ne.s32.totalorder %s77, %s80
      %p86 = scmp.eq.s32.totalorder %s15, 0
      %p87 = por %p85, %p86
      %p88 = scmp.ne.s32.totalorder %s77, %s80
      %p89 = scmp.eq.s32.totalorder %s20, 2
      %p90 = por %p88, %p89
      %p91 = scmp.ne.s32.totalorder %s80, %s81
      %p92 = scmp.eq.s32.totalorder %s20, 0
      %p93 = por %p91, %p92
      %p94 = scmp.ne.s32.totalorder %s80, %s81
      %p95 = scmp.eq.s32.totalorder %s21, 2
      %p96 = por %p94, %p95
      %p98 = scmp.ne.s32.totalorder %s81, %s97
      %p99 = scmp.eq.s32.totalorder %s21, 0
      %p100 = por %p98, %p99
      %s101 = ssub.s32 %s15, %s22
      %p102 = scmp.eq.s32.totalorder %s101, 0
      %s104 = sadd.s32 %s103, 1
      %s105 = scalar_select %p102, %s103, %s104
      %p108 = pneg %p102
      %p109 = scmp.eq.s32.totalorder %s15, 2
      %p110 = por %p108, %p109
      %p111 = scmp.ne.s32.totalorder %s103, %s106
      %p112 = scmp.eq.s32.totalorder %s15, 0
      %p113 = por %p111, %p112
      %p114 = scmp.ne.s32.totalorder %s103, %s106
      %p115 = scmp.eq.s32.totalorder %s20, 2
      %p116 = por %p114, %p115
      %p117 = scmp.ne.s32.totalorder %s106, %s107
      %p118 = scmp.eq.s32.totalorder %s20, 0
      %p119 = por %p117, %p118
      %p120 = scmp.ne.s32.totalorder %s106, %s107
      %p121 = scmp.eq.s32.totalorder %s21, 2
      %p122 = por %p120, %p121
      %p124 = scmp.ne.s32.totalorder %s107, %s123
      %p125 = scmp.eq.s32.totalorder %s21, 0
      %p126 = por %p124, %p125
      %s127 = ssub.s32 %s15, %s22
      %p128 = scmp.eq.s32.totalorder %s127, 0
      %s130 = sadd.s32 %s129, 1
      %s131 = scalar_select %p128, %s129, %s130
      %p134 = pneg %p128
      %p135 = scmp.eq.s32.totalorder %s15, 2
      %p136 = por %p134, %p135
      %p137 = scmp.ne.s32.totalorder %s129, %s132
      %p138 = scmp.eq.s32.totalorder %s15, 0
      %p139 = por %p137, %p138
      %p140 = scmp.ne.s32.totalorder %s129, %s132
      %p141 = scmp.eq.s32.totalorder %s20, 2
      %p142 = por %p140, %p141
      %p143 = scmp.ne.s32.totalorder %s132, %s133
      %p144 = scmp.eq.s32.totalorder %s20, 0
      %p145 = por %p143, %p144
      %p146 = scmp.ne.s32.totalorder %s132, %s133
      %p147 = scmp.eq.s32.totalorder %s21, 2
      %p148 = por %p146, %p147
      %p150 = scmp.ne.s32.totalorder %s133, %s149
      %p151 = scmp.eq.s32.totalorder %s21, 0
      %p152 = por %p150, %p151
      %s153 = ssub.s32 %s15, %s22
      %p154 = scmp.eq.s32.totalorder %s153, 0
      %s156 = sadd.s32 %s155, 1
      %s157 = scalar_select %p154, %s155, %s156
      %p160 = pneg %p154
      %p161 = scmp.eq.s32.totalorder %s15, 2
      %p162 = por %p160, %p161
      %p163 = scmp.ne.s32.totalorder %s155, %s158
      %p164 = scmp.eq.s32.totalorder %s15, 0
      %p165 = por %p163, %p164
      %p166 = scmp.ne.s32.totalorder %s155, %s158
      %p167 = scmp.eq.s32.totalorder %s20, 2
      %p168 = por %p166, %p167
      %p169 = scmp.ne.s32.totalorder %s158, %s159
      %p170 = scmp.eq.s32.totalorder %s20, 0
      %p171 = por %p169, %p170
      %p172 = scmp.ne.s32.totalorder %s158, %s159
      %p173 = scmp.eq.s32.totalorder %s21, 2
      %p174 = por %p172, %p173
      %p176 = scmp.ne.s32.totalorder %s159, %s175
      %p177 = scmp.eq.s32.totalorder %s21, 0
      %p178 = por %p176, %p177
      %s179 = ssub.s32 %s15, %s22
      %p180 = scmp.eq.s32.totalorder %s179, 0
      %s182 = sadd.s32 %s181, 1
      %s183 = scalar_select %p180, %s181, %s182
      %p186 = pneg %p180
      %p187 = scmp.eq.s32.totalorder %s15, 2
      %p188 = por %p186, %p187
      %p189 = scmp.ne.s32.totalorder %s181, %s184
      %p190 = scmp.eq.s32.totalorder %s15, 0
      %p191 = por %p189, %p190
      %p192 = scmp.ne.s32.totalorder %s181, %s184
      %p193 = scmp.eq.s32.totalorder %s20, 2
      %p194 = por %p192, %p193
      %p195 = scmp.ne.s32.totalorder %s184, %s185
      %p196 = scmp.eq.s32.totalorder %s20, 0
      %p197 = por %p195, %p196
      %p198 = scmp.ne.s32.totalorder %s184, %s185
      %p199 = scmp.eq.s32.totalorder %s21, 2
      %p200 = por %p198, %p199
      %p202 = scmp.ne.s32.totalorder %s185, %s201
      %p203 = scmp.eq.s32.totalorder %s21, 0
      %p204 = por %p202, %p203
      %s206 = sadd.s32 %s205, 1
      %p209 = scmp.eq.s32.totalorder %s15, 2
      %p210 = scmp.ne.s32.totalorder %s205, %s207
      %p211 = scmp.eq.s32.totalorder %s15, 0
      %p212 = por %p210, %p211
      %p213 = scmp.ne.s32.totalorder %s205, %s207
      %p214 = scmp.eq.s32.totalorder %s20, 2
      %p215 = por %p213, %p214
      %p216 = scmp.ne.s32.totalorder %s207, %s208
      %p217 = scmp.eq.s32.totalorder %s20, 0
      %p218 = por %p216, %p217
      %p219 = scmp.ne.s32.totalorder %s207, %s208
      %p220 = scmp.eq.s32.totalorder %s21, 2
      %p221 = por %p219, %p220
      %p223 = scmp.ne.s32.totalorder %s208, %s222
      %p224 = scmp.eq.s32.totalorder %s21, 0
      %p225 = por %p223, %p224
      %s227 = sadd.s32 %s226, 1
      %p230 = scmp.eq.s32.totalorder %s15, 2
      %p231 = scmp.ne.s32.totalorder %s226, %s228
      %p232 = scmp.eq.s32.totalorder %s15, 0
      %p233 = por %p231, %p232
      %p234 = scmp.ne.s32.totalorder %s226, %s228
      %p235 = scmp.eq.s32.totalorder %s20, 2
      %p236 = por %p234, %p235
      %p237 = scmp.ne.s32.totalorder %s228, %s229
      %p238 = scmp.eq.s32.totalorder %s20, 0
      %p239 = por %p237, %p238
      %p240 = scmp.ne.s32.totalorder %s228, %s229
      %p241 = scmp.eq.s32.totalorder %s21, 2
      %p242 = por %p240, %p241
      %p244 = scmp.ne.s32.totalorder %s229, %s243
      %p245 = scmp.eq.s32.totalorder %s21, 0
      %p246 = por %p244, %p245
      %p247 = scmp.le.s32.totalorder 1, %s15
      %p248 = scmp.lt.s32.totalorder %s15, 4
      %p249 = pnand %p247, %p248
      %p250 = pneg %p249
      // Predicated region
      $region9: #{hetero_gnn_forward.1} parent=5 // pred_check
        _
      $region10: #{hetero_gnn_forward.1} parent=5 // pred_check_branch
        %252 = sbr.rel (%p249) target = $region12
      $region11: #{hetero_gnn_forward.1} parent=5 // pred_region
        %s253 = ssub.s32 %s15, 1
        // Predicated region
        $region13: #{hetero_gnn_forward.1} parent=11 // pred_check
          %p254 = pneg %p218
        $region14: #{hetero_gnn_forward.1} parent=11 // pred_check_branch
          %256 = sbr.rel (%p254) target = $region16
        $region15: #{hetero_gnn_forward.1} parent=11 // pred_region
          _
        $region16: #{hetero_gnn_forward.1} parent=11 // pred_fallthru
          _
      $region12: #{hetero_gnn_forward.1} parent=5 // pred_fallthru
        _
      %p257 = scmp.lt.s32.totalorder %s15, 3
      // Predicated region
      $region17: #{hetero_gnn_forward.1} parent=5 // pred_check
        %p258 = pneg %p257
      $region18: #{hetero_gnn_forward.1} parent=5 // pred_check_branch
        %260 = sbr.rel (%p258) target = $region20
      $region19: #{hetero_gnn_forward.1} parent=5 // pred_region
        // Predicated region
        $region21: #{hetero_gnn_forward.1} parent=19 // pred_check
          %p261 = pneg %p35
        $region22: #{hetero_gnn_forward.1} parent=19 // pred_check_branch
          %263 = sbr.rel (%p261) target = $region24
        $region23: #{hetero_gnn_forward.1} parent=19 // pred_region
          %p264 = scmp.lt.s32.totalorder %s15, 2
          %s265 = scalar_select %p264, %s15, 2
          %s266 = smul.addr %s265, 8
          %s267 = scalar_lea.vmem %s0, %s266
        $region24: #{hetero_gnn_forward.1} parent=19 // pred_fallthru
          _
        // Predicated region
        $region25: #{hetero_gnn_forward.1} parent=19 // pred_check
          %p268 = pneg %p61
        $region26: #{hetero_gnn_forward.1} parent=19 // pred_check_branch
          %270 = sbr.rel (%p268) target = $region28
        $region27: #{hetero_gnn_forward.1} parent=19 // pred_region
          %p271 = scmp.lt.s32.totalorder %s15, 2
          %s272 = scalar_select %p271, %s15, 2
          %s273 = smul.addr %s272, 8
          %s274 = scalar_lea.vmem %s1, %s273
        $region28: #{hetero_gnn_forward.1} parent=19 // pred_fallthru
          _
        // Predicated region
        $region29: #{hetero_gnn_forward.1} parent=19 // pred_check
          %p275 = pneg %p87
        $region30: #{hetero_gnn_forward.1} parent=19 // pred_check_branch
          %277 = sbr.rel (%p275) target = $region32
        $region31: #{hetero_gnn_forward.1} parent=19 // pred_region
          %p278 = scmp.lt.s32.totalorder %s15, 2
          %s279 = scalar_select %p278, %s15, 2
          %s280 = smul.addr %s279, 2
          %s281 = smul.addr %s280, 8
          %s282 = scalar_lea.vmem %s2, %s281
        $region32: #{hetero_gnn_forward.1} parent=19 // pred_fallthru
          _
        // Predicated region
        $region33: #{hetero_gnn_forward.1} parent=19 // pred_check
          %p283 = pneg %p113
        $region34: #{hetero_gnn_forward.1} parent=19 // pred_check_branch
          %285 = sbr.rel (%p283) target = $region36
        $region35: #{hetero_gnn_forward.1} parent=19 // pred_region
          %p286 = scmp.lt.s32.totalorder %s15, 2
          %s287 = scalar_select %p286, %s15, 2
          %s288 = scalar_lea.vmem %s3, %s287
        $region36: #{hetero_gnn_forward.1} parent=19 // pred_fallthru
          _
        // Predicated region
        $region37: #{hetero_gnn_forward.1} parent=19 // pred_check
          %p289 = pneg %p139
        $region38: #{hetero_gnn_forward.1} parent=19 // pred_check_branch
          %291 = sbr.rel (%p289) target = $region40
        $region39: #{hetero_gnn_forward.1} parent=19 // pred_region
          %p292 = scmp.lt.s32.totalorder %s15, 2
          %s293 = scalar_select %p292, %s15, 2
          %s294 = smul.addr %s293, 4
          %s295 = smul.addr %s294, 8
          %s296 = scalar_lea.vmem %s4, %s295
        $region40: #{hetero_gnn_forward.1} parent=19 // pred_fallthru
          _
        // Predicated region
        $region41: #{hetero_gnn_forward.1} parent=19 // pred_check
          %p297 = pneg %p165
        $region42: #{hetero_gnn_forward.1} parent=19 // pred_check_branch
          %299 = sbr.rel (%p297) target = $region44
        $region43: #{hetero_gnn_forward.1} parent=19 // pred_region
          %p300 = scmp.lt.s32.totalorder %s15, 2
          %s301 = scalar_select %p300, %s15, 2
          %s302 = scalar_lea.vmem %s5, %s301
        $region44: #{hetero_gnn_forward.1} parent=19 // pred_fallthru
          _
        // Predicated region
        $region45: #{hetero_gnn_forward.1} parent=19 // pred_check
          %p303 = pneg %p191
        $region46: #{hetero_gnn_forward.1} parent=19 // pred_check_branch
          %305 = sbr.rel (%p303) target = $region48
        $region47: #{hetero_gnn_forward.1} parent=19 // pred_region
          %p306 = scmp.lt.s32.totalorder %s15, 2
          %s307 = scalar_select %p306, %s15, 2
          %s308 = smul.addr %s307, 4
          %s309 = smul.addr %s308, 8
          %s310 = scalar_lea.vmem %s6, %s309
        $region48: #{hetero_gnn_forward.1} parent=19 // pred_fallthru
          _
      $region20: #{hetero_gnn_forward.1} parent=5 // pred_fallthru
        _
      %p311 = scmp.le.s32.totalorder 1, %s15
      %p312 = scmp.lt.s32.totalorder %s15, 4
      %p313 = pnand %p311, %p312
      %p314 = pneg %p313
      // Predicated region
      $region49: #{hetero_gnn_forward.1} parent=5 // pred_check
        _
      $region50: #{hetero_gnn_forward.1} parent=5 // pred_check_branch
        %316 = sbr.rel (%p313) target = $region52
      $region51: #{hetero_gnn_forward.1} parent=5 // pred_region
        %s317 = ssub.s32 %s15, 1
        %p318 = scmp.lt.s32.totalorder %s20, 2
        %s319 = scalar_select %p318, %s20, 2
        %s320 = smul.addr %s319, 8
        %s321 = scalar_lea.vmem %s0, %s320
        %p322 = pneg %p41
        %p323 = pneg %p38
        %p324 = scmp.lt.s32.totalorder %s20, 2
        %s325 = scalar_select %p324, %s20, 2
        %s326 = smul.addr %s325, 8
        %s327 = scalar_lea.vmem %s1, %s326
        %p328 = pneg %p67
        %p329 = pneg %p64
        %p330 = scmp.lt.s32.totalorder %s20, 2
        %s331 = scalar_select %p330, %s20, 2
        %s332 = smul.addr %s331, 2
        %s333 = smul.addr %s332, 8
        %s334 = scalar_lea.vmem %s2, %s333
        %p335 = pneg %p93
        %p336 = pneg %p90
        %p337 = scmp.lt.s32.totalorder %s20, 2
        %s338 = scalar_select %p337, %s20, 2
        %s339 = scalar_lea.vmem %s3, %s338
        %p340 = pneg %p119
        %p341 = pneg %p116
        %p342 = scmp.lt.s32.totalorder %s20, 2
        %s343 = scalar_select %p342, %s20, 2
        %s344 = smul.addr %s343, 4
        %s345 = smul.addr %s344, 8
        %s346 = scalar_lea.vmem %s4, %s345
        %p347 = pneg %p145
        %p348 = pneg %p142
        %p349 = scmp.lt.s32.totalorder %s20, 2
        %s350 = scalar_select %p349, %s20, 2
        %s351 = scalar_lea.vmem %s5, %s350
        %p352 = pneg %p171
        %p353 = pneg %p168
        %p354 = scmp.lt.s32.totalorder %s20, 2
        %s355 = scalar_select %p354, %s20, 2
        %s356 = smul.addr %s355, 4
        %s357 = smul.addr %s356, 8
        %s358 = scalar_lea.vmem %s6, %s357
        %p359 = pneg %p197
        %p360 = pneg %p194
        %p361 = pneg %p218
        %p362 = pneg %p215
        %p363 = pneg %p239
        %p364 = pneg %p236
        %p365 = scmp.lt.s32.totalorder %s20, 2
        %s366 = scalar_select %p365, %s20, 2
        %s367 = smul.addr %s366, 8
        %s368 = scalar_lea.vmem %s0, %s367
        %p369 = scmp.lt.s32.totalorder %s20, 2
        %s370 = scalar_select %p369, %s20, 2
        %s371 = smul.addr %s370, 8
        %s372 = scalar_lea.vmem %s1, %s371
        %p373 = scmp.lt.s32.totalorder %s20, 2
        %s374 = scalar_select %p373, %s20, 2
        %s375 = smul.addr %s374, 2
        %s376 = smul.addr %s375, 8
        %s377 = scalar_lea.vmem %s2, %s376
        %p378 = scmp.lt.s32.totalorder %s20, 2
        %s379 = scalar_select %p378, %s20, 2
        %s380 = scalar_lea.vmem %s3, %s379
        %p381 = scmp.lt.s32.totalorder %s20, 2
        %s382 = scalar_select %p381, %s20, 2
        %s383 = smul.addr %s382, 4
        %s384 = smul.addr %s383, 8
        %s385 = scalar_lea.vmem %s4, %s384
        %p386 = scmp.lt.s32.totalorder %s20, 2
        %s387 = scalar_select %p386, %s20, 2
        %s388 = scalar_lea.vmem %s5, %s387
        %p389 = scmp.lt.s32.totalorder %s20, 2
        %s390 = scalar_select %p389, %s20, 2
        %s391 = smul.addr %s390, 4
        %s392 = smul.addr %s391, 8
        %s393 = scalar_lea.vmem %s6, %s392
        %p394 = scmp.eq.s32.totalorder %s20, 0
        // Predicated region
        $region53: #{hetero_gnn_forward.1} parent=51 // pred_check
          %p395 = pneg %p394
        $region54: #{hetero_gnn_forward.1} parent=51 // pred_check_branch
          %397 = sbr.rel (%p395) target = $region56
        $region55: #{hetero_gnn_forward.1} parent=51 // pred_region
          %v398 = vld [vmem:[%s7] sm:$0x1]
          %v400 = vperm.slane %v398, 0
          %402 = vst [vmem:[#allocation2] sm:$0xff] %v400
        $region56: #{hetero_gnn_forward.1} parent=51 // pred_fallthru
          _
        %v403 = vld [vmem:[%s368] sm:$0xff]
        %v404 = vld [vmem:[%s377] sm:$0xff]
        %v405 = vld [vmem:[%s377 + $0x8] sm:$0xff]
        %v406 = vld [vmem:[%s380] sm:$0x1]
        %v408 = vperm.slane %v406, 0
        %vm410 = vcmask 130048
        %v412 = vsel %vm410, %v403, 0
        %414 = vmatpush.msra.mxu0 0.0
        %415 = vmatpush.msra.mxu0 0.0
        %416 = vmatpush.msra.mxu0 0.0
        %417 = vmatpush.msra.mxu0 0.0
        %418 = vmatpush.msra.mxu0 0.0
        %419 = vmatpush.msra.mxu0 0.0
        %420 = vmatpush.msra.mxu0 0.0
        %421 = vmatpush.msra.mxu0 0.0
        %422 = vmatpush.msra.mxu0 0.0
        %423 = vmatpush.msra.mxu0 0.0
        %424 = vmatpush.msra.mxu0 0.0
        %425 = vmatpush.msra.mxu0 0.0
        %426 = vmatpush.msra.mxu0 0.0
        %427 = vmatpush.msra.mxu0 0.0
        %428 = vmatpush.msra.mxu0 %v405
        %429 = vmatpush.msra.mxu0 %v404
        %430 = vmatmul.f32.gmra.mxu0 %v412
        %v431 = vpop.f32.mrf.mxu0
        %v432 = vadd.f32 %v408, %v431
        %433 = vdwg.mxu0
        %v434 = vmax.f32 %v432, 0.0
        %v435 = vld [vmem:[%s372] sm:$0xff]
        %vm436 = vcmask 64512
        %v438 = vsel %vm436, %v435, 0
        %440 = vmatpush.msra.mxu0 0.0
        %441 = vmatpush.msra.mxu0 0.0
        %442 = vmatpush.msra.mxu0 0.0
        %443 = vmatpush.msra.mxu0 0.0
        %444 = vmatpush.msra.mxu0 0.0
        %445 = vmatpush.msra.mxu0 0.0
        %446 = vmatpush.msra.mxu0 0.0
        %447 = vmatpush.msra.mxu0 0.0
        %448 = vmatpush.msra.mxu0 0.0
        %449 = vmatpush.msra.mxu0 0.0
        %450 = vmatpush.msra.mxu0 0.0
        %451 = vmatpush.msra.mxu0 0.0
        %452 = vmatpush.msra.mxu0 0.0
        %453 = vmatpush.msra.mxu0 0.0
        %454 = vmatpush.msra.mxu0 0.0
        %455 = vmatpush.msra.mxu0 %v434
        %456 = vmatmul.f32.gmra.mxu0 %v438
        %v457 = vpop.f32.mrf.mxu0
        %v458 = vadd.f32 0.0, %v457
        %459 = vdwg.mxu0
        %v460 = vld [vmem:[%s385] sm:$0xff]
        %v461 = vld [vmem:[%s385 + $0x8] sm:$0xff]
        %v462 = vld [vmem:[%s385 + $0x10] sm:$0xff]
        %v463 = vld [vmem:[%s385 + $0x18] sm:$0xff]
        %v464 = vld [vmem:[%s388] sm:$0x1]
        %v466 = vperm.slane %v464, 0
        %vm468 = vcmask 261120
        %v470 = vsel %vm468, %v458, 0
        %472 = vmatpush.msra.mxu0 0.0
        %473 = vmatpush.msra.mxu0 0.0
        %474 = vmatpush.msra.mxu0 0.0
        %475 = vmatpush.msra.mxu0 0.0
        %476 = vmatpush.msra.mxu0 0.0
        %477 = vmatpush.msra.mxu0 0.0
        %478 = vmatpush.msra.mxu0 0.0
        %479 = vmatpush.msra.mxu0 0.0
        %480 = vmatpush.msra.mxu0 0.0
        %481 = vmatpush.msra.mxu0 0.0
        %482 = vmatpush.msra.mxu0 0.0
        %483 = vmatpush.msra.mxu0 0.0
        %484 = vmatpush.msra.mxu0 %v463
        %485 = vmatpush.msra.mxu0 %v462
        %486 = vmatpush.msra.mxu0 %v461
        %487 = vmatpush.msra.mxu0 %v460
        %488 = vmatmul.f32.gmra.mxu0 %v470
        %v489 = vpop.f32.mrf.mxu0
        %v490 = vadd.f32 %v466, %v489
        %491 = vdwg.mxu0
        %v492 = vmax.f32 %v490, 0.0
        %v493 = vld [vmem:[#allocation2] sm:$0xff]
        %v494 = vld [vmem:[%s393] sm:$0xff]
        %v495 = vld [vmem:[%s393 + $0x8] sm:$0xff]
        %v496 = vld [vmem:[%s393 + $0x10] sm:$0xff]
        %v497 = vld [vmem:[%s393 + $0x18] sm:$0xff]
        %v499 = vsel %vm468, %v492, 0
        %501 = vmatpush.msra.mxu0 0.0
        %502 = vmatpush.msra.mxu0 0.0
        %503 = vmatpush.msra.mxu0 0.0
        %504 = vmatpush.msra.mxu0 0.0
        %505 = vmatpush.msra.mxu0 0.0
        %506 = vmatpush.msra.mxu0 0.0
        %507 = vmatpush.msra.mxu0 0.0
        %508 = vmatpush.msra.mxu0 0.0
        %509 = vmatpush.msra.mxu0 0.0
        %510 = vmatpush.msra.mxu0 0.0
        %511 = vmatpush.msra.mxu0 0.0
        %512 = vmatpush.msra.mxu0 0.0
        %513 = vmatpush.msra.mxu0 %v497
        %514 = vmatpush.msra.mxu0 %v496
        %515 = vmatpush.msra.mxu0 %v495
        %516 = vmatpush.msra.mxu0 %v494
        %517 = vmatmul.f32.gmra.mxu0 %v499
        %v518 = vpop.f32.mrf.mxu0
        %v519 = vadd.f32 0.0, %v518
        %520 = vdwg.mxu0
        %v521 = vadd.f32 %v493, %v519
        %522 = vst [vmem:[#allocation2] sm:$0xff] %v521
        %p523 = scmp.eq.s32.totalorder %s20, 2
        // Predicated region
        $region57: #{hetero_gnn_forward.1} parent=51 // pred_check
          %p524 = pneg %p523
        $region58: #{hetero_gnn_forward.1} parent=51 // pred_check_branch
          %526 = sbr.rel (%p524) target = $region60
        $region59: #{hetero_gnn_forward.1} parent=51 // pred_region
          %v527 = vld [vmem:[#allocation2] sm:$0xff]
          %528 = vmax.xlane.f32.xlu0 %v527
          %v529 = vpop.xlane.xlu0 %528
          %v530 = vsub.f32 %v527, %v529
          %v531 = vmul.f32 %v530, 1.442695
          %v532 = vpow.pop %v531
          %533 = vadd.xlane.f32.xlu0 %v532
          %v534 = vpop.xlane.xlu0 %533
          %v535 = vlog2.pop %v534
          %v536 = vmul.f32 %v535, 0.6931472
          %v537 = vadd.f32 %v536, %v529
          %v538 = vsub.f32 %v527, %v537
          %539 = vst [vmem:[#allocation2] sm:$0xff] %v538
        $region60: #{hetero_gnn_forward.1} parent=51 // pred_fallthru
          _
        // Predicated region
        $region61: #{hetero_gnn_forward.1} parent=51 // pred_check
          %p540 = pneg %p236
        $region62: #{hetero_gnn_forward.1} parent=51 // pred_check_branch
          %542 = sbr.rel (%p540) target = $region64
        $region63: #{hetero_gnn_forward.1} parent=51 // pred_region
          %544 = vsyncadd [#allocation3], 0
          %s546 = sshll.u32 [#allocation2], 4
          %s547 = int_to_ptr.vmem [resolvable:$true] %s546
          %s548 = sshll.u32 %s8, 4
          %s549 = int_to_ptr.hbm [resolvable:$true] %s548
          %551 = dma.vmem_to_hbm [thread:$0]  %s547, 128, %s549, [#allocation3]
        $region64: #{hetero_gnn_forward.1} parent=51 // pred_fallthru
          _
        // Predicated region
        $region65: #{hetero_gnn_forward.1} parent=51 // pred_check
          %p552 = pneg %p236
        $region66: #{hetero_gnn_forward.1} parent=51 // pred_check_branch
          %554 = sbr.rel (%p552) target = $region68
        $region67: #{hetero_gnn_forward.1} parent=51 // pred_region
          %556 = dma.done [#allocation3], 128
        $region68: #{hetero_gnn_forward.1} parent=51 // pred_fallthru
          _
      $region52: #{hetero_gnn_forward.1} parent=5 // pred_fallthru
        _
      %p557 = scmp.le.s32.totalorder 2, %s15
      // Predicated region
      $region69: #{hetero_gnn_forward.1} parent=5 // pred_check
        %p558 = pneg %p557
      $region70: #{hetero_gnn_forward.1} parent=5 // pred_check_branch
        %560 = sbr.rel (%p558) target = $region72
      $region71: #{hetero_gnn_forward.1} parent=5 // pred_region
        %s561 = ssub.s32 %s15, 2
      $region72: #{hetero_gnn_forward.1} parent=5 // pred_fallthru
        _
    $region6: #{hetero_gnn_forward.1} parent=1 // loop_footer
      %s19 = sadd.s32 1, %s15
    $region7: #{hetero_gnn_forward.1} parent=1 // loop_footer_branch
      %14 = sbr.rel target = $region3
    $region8: #{hetero_gnn_forward.1} parent=1 // loop_exit
      _
    %562 = vsyncpa [#allocation3], 1
    %s563 = scalar_lea.sflag [#allocation3], 1
    %564 = vsyncpa %s563, 1

</llo_original>
